<compile_context>
chip_gen: v5e
topology: v5e:2x2
jax: 0.10.0
libtpu: 0.0.40
codegen_flags: <defaults>
</compile_context>

<pallas_src>
import jax
import jax.numpy as jnp
from jax.experimental import pallas as pl
from jax.experimental.pallas import tpu as pltpu

HIDDEN = 64
LANES = 128
TB_MAX = 2048                     # batch-tile cap (VMEM ~8 MiB double-buffered)
MIN_SPLIT_B = 1024                # force >=2 grid steps above this (v7x: 2 TCs)
VMEM_LIMIT = 32 * 1024 * 1024     # raise v5e's 16 MiB scoped default; <= v7x physical
# Matmul operand dtype. f32 bit-matches the reference; set jnp.bfloat16 for 2x
# MXU throughput + half the weight/activation DMA bytes (loosen the 1e-5 check,
# and round TB to a multiple of 16).  Elementwise tail always stays f32.
MATMUL_DTYPE = jnp.float32


def _round_up(x, m):
    return (x + m - 1) // m * m


def _cdiv(a, b):
    return -(-a // b)


def _decoder_kernel(w_ref, z_ref, eps_ref,
                    w1w_ref, w1z_ref, b1_ref,
                    w2_ref, b2_ref,
                    w3_ref, b3_ref,
                    out_ref):
    """One batch tile.  out_ref is the packed (TB, PACK) tile:
       [ mu(0:d) | logvar(d:2d) | sample(2d:3d) | zero pad(3d:PACK) ]."""
    md = w1w_ref.dtype  # matmul operand dtype (f32 or bf16); accumulation is f32

    # layer 1: relu(w @ W1_w + z @ W1_z + b1)   (concat-free split matmul)
    h1 = jnp.dot(w_ref[...].astype(md), w1w_ref[...],
                 preferred_element_type=jnp.float32)
    h1 = h1 + jnp.dot(z_ref[...].astype(md), w1z_ref[...],
                      preferred_element_type=jnp.float32)
    h1 = jnp.maximum(h1 + b1_ref[...], 0.0)

    # layer 2: relu(h1 @ W2 + b2)
    h2 = jnp.dot(h1.astype(md), w2_ref[...], preferred_element_type=jnp.float32)
    h2 = jnp.maximum(h2 + b2_ref[...], 0.0)

    # layer 3: single matmul; W3's columns are already ordered [mu | logvar],
    # so out3 is already in packed lane order for the first 2d lanes.
    out3 = jnp.dot(h2.astype(md), w3_ref[...],
                   preferred_element_type=jnp.float32) + b3_ref[...]

    d = eps_ref.shape[-1]            # dim_out (static)
    mu = out3[:, :d]
    lv = out3[:, d:]
    # reparameterization: sample = eps * exp(0.5 * logvar) + mu   (exp -> EUP slot)
    sm = eps_ref[...] * jnp.exp(0.5 * lv) + mu

    pad = out_ref.shape[-1] - 3 * d
    pieces = [out3, sm]
    if pad > 0:
        pieces.append(jnp.zeros((out3.shape[0], pad), jnp.float32))
    # one lane-dense, unmasked 128-wide store per tile
    out_ref[...] = jnp.concatenate(pieces, axis=-1)


def decoder_x_forward(w, z, params, eps):
    """w: (B, dim_w), z: (B, dim_z); returns (mu, logvar, sample), each (B, dim_out)."""
    w = w.astype(jnp.float32)
    z = z.astype(jnp.float32)
    eps = eps.astype(jnp.float32)

    B, dim_w = w.shape
    _, dim_z = z.shape
    w1, b1, w2, b2, w3, b3 = params
    dim_out = w3.shape[1] // 2

    # --- parameter re-layout (host-side, one-time) ---------------------------
    md = MATMUL_DTYPE
    w1w = w1[:dim_w, :].astype(md)                      # (dim_w, H)
    w1z = w1[dim_w:, :].astype(md)                      # (dim_z, H)
    b1r = b1.reshape(1, HIDDEN).astype(jnp.float32)
    w2c = w2.astype(md)                                 # (H, H)
    b2r = b2.reshape(1, HIDDEN).astype(jnp.float32)
    w3c = w3.astype(md)                                 # (H, 2*dim_out) = [mu | lv]
    b3r = b3.reshape(1, 2 * dim_out).astype(jnp.float32)

    PACK = _round_up(3 * dim_out, LANES)                # packed lane-dense output width

    # --- adaptive batch tiling -----------------------------------------------
    n_tiles = _cdiv(B, TB_MAX)
    if B >= MIN_SPLIT_B:
        n_tiles = max(n_tiles, 2)                       # keep both v7x TCs busy
    TB = _round_up(_cdiv(B, n_tiles), 8)
    Bp = n_tiles * TB
    pad_b = Bp - B
    w_p = jnp.pad(w, ((0, pad_b), (0, 0)))
    z_p = jnp.pad(z, ((0, pad_b), (0, 0)))
    eps_p = jnp.pad(eps, ((0, pad_b), (0, 0)))          # no lane padding on eps

    tile = lambda feat: pl.BlockSpec((TB, feat), lambda i: (i, 0))
    resident = lambda a: pl.BlockSpec(a.shape, lambda i: (0, 0))  # VMEM-resident params

    packed = pl.pallas_call(
        _decoder_kernel,
        out_shape=jax.ShapeDtypeStruct((Bp, PACK), jnp.float32),
        grid=(n_tiles,),
        in_specs=[
            tile(dim_w), tile(dim_z), tile(dim_out),
            resident(w1w), resident(w1z), resident(b1r),
            resident(w2c), resident(b2r),
            resident(w3c), resident(b3r),
        ],
        out_specs=tile(PACK),
        compiler_params=pltpu.CompilerParams(
            dimension_semantics=("parallel",),
            vmem_limit_bytes=VMEM_LIMIT,
        ),
    )(w_p, z_p, eps_p, w1w, w1z, b1r, w2c, b2r, w3c, b3r)

    # strip batch padding and unpack the lane-packed output (layout plumbing only)
    mu = packed[:B, :dim_out]
    logvar = packed[:B, dim_out:2 * dim_out]
    sample = packed[:B, 2 * dim_out:3 * dim_out]
    return mu, logvar, sample


def init_params(key, dim_in, dim_out):
    """Deterministic synthetic weights matching nn.Linear shapes.

    Stored transposed (in, out) so the kernel does x @ W directly; biases (out,).
    """
    k1, k2, k3, k4, k5, k6 = jax.random.split(key, 6)
    w1 = 0.1 * jax.random.normal(k1, (dim_in, HIDDEN), jnp.float32)
    b1 = 0.1 * jax.random.normal(k2, (HIDDEN,), jnp.float32)
    w2 = 0.1 * jax.random.normal(k3, (HIDDEN, HIDDEN), jnp.float32)
    b2 = 0.1 * jax.random.normal(k4, (HIDDEN,), jnp.float32)
    w3 = 0.1 * jax.random.normal(k5, (HIDDEN, 2 * dim_out), jnp.float32)
    b3 = 0.1 * jax.random.normal(k6, (2 * dim_out,), jnp.float32)
    return (w1, b1, w2, b2, w3, b3)


if __name__ == "__main__":
    key = jax.random.PRNGKey(0)
    kw, kz, kp, ke = jax.random.split(key, 4)

    B = 8
    dim_w, dim_z = 16, 16          # dim_in = 32
    dim_out = 32

    w = jax.random.normal(kw, (B, dim_w), jnp.float32)
    z = jax.random.normal(kz, (B, dim_z), jnp.float32)
    params = init_params(kp, dim_w + dim_z, dim_out)
    eps = jax.random.normal(ke, (B, dim_out), jnp.float32)   # torch.randn_like(mu)

    mu, logvar, sample = decoder_x_forward(w, z, params, eps)
    jax.block_until_ready((mu, logvar, sample))

    # Pure-JAX reference of the same math.
    x = jnp.concatenate([w, z], axis=-1)
    w1, b1, w2, b2, w3, b3 = params
    h1 = jnp.maximum(x @ w1 + b1, 0.0)
    h2 = jnp.maximum(h1 @ w2 + b2, 0.0)
    out = h2 @ w3 + b3
    mu_ref, logvar_ref = out[:, :dim_out], out[:, dim_out:]
    sample_ref = eps * jnp.exp(0.5 * logvar_ref) + mu_ref
    assert jnp.allclose(mu, mu_ref, atol=1e-5)
    assert jnp.allclose(logvar, logvar_ref, atol=1e-5)
    assert jnp.allclose(sample, sample_ref, atol=1e-5)

    print("KERNEL_OK")
</pallas_src>

<mosaic_0001>
module attributes {stable_mosaic.version = 11 : i64} {
  func.func @_decoder_kernel(%arg0: i32, %arg1: memref<8x16xf32, #tpu.memory_space<vmem>>, %arg2: memref<8x16xf32, #tpu.memory_space<vmem>>, %arg3: memref<8x32xf32, #tpu.memory_space<vmem>>, %arg4: memref<16x64xf32, #tpu.memory_space<vmem>>, %arg5: memref<16x64xf32, #tpu.memory_space<vmem>>, %arg6: memref<1x64xf32, #tpu.memory_space<vmem>>, %arg7: memref<64x64xf32, #tpu.memory_space<vmem>>, %arg8: memref<1x64xf32, #tpu.memory_space<vmem>>, %arg9: memref<64x64xf32, #tpu.memory_space<vmem>>, %arg10: memref<1x64xf32, #tpu.memory_space<vmem>>, %arg11: memref<8x128xf32, #tpu.memory_space<vmem>>) attributes {dimension_semantics = [#tpu.dimension_semantics<parallel>], iteration_bounds = array<i64: 1>, scalar_prefetch = 0 : i64, scratch_operands = 0 : i64, tpu.core_type = #tpu.core_type<tc>, window_params = [{transform_indices = @transform_0, window_bounds = array<i64: 8, 16>}, {transform_indices = @transform_1, window_bounds = array<i64: 8, 16>}, {transform_indices = @transform_2, window_bounds = array<i64: 8, 32>}, {pipeline_mode = #tpu.pipeline_mode<synchronous>, transform_indices = @transform_3, window_bounds = array<i64: 16, 64>}, {pipeline_mode = #tpu.pipeline_mode<synchronous>, transform_indices = @transform_4, window_bounds = array<i64: 16, 64>}, {pipeline_mode = #tpu.pipeline_mode<synchronous>, transform_indices = @transform_5, window_bounds = array<i64: 1, 64>}, {pipeline_mode = #tpu.pipeline_mode<synchronous>, transform_indices = @transform_6, window_bounds = array<i64: 64, 64>}, {pipeline_mode = #tpu.pipeline_mode<synchronous>, transform_indices = @transform_7, window_bounds = array<i64: 1, 64>}, {pipeline_mode = #tpu.pipeline_mode<synchronous>, transform_indices = @transform_8, window_bounds = array<i64: 64, 64>}, {pipeline_mode = #tpu.pipeline_mode<synchronous>, transform_indices = @transform_9, window_bounds = array<i64: 1, 64>}, {transform_indices = @transform_10, window_bounds = array<i64: 8, 128>}]} {
    %c0 = arith.constant 0 : index
    %c0_0 = arith.constant 0 : index
    %0 = vector.load %arg1[%c0, %c0_0] : memref<8x16xf32, #tpu.memory_space<vmem>>, vector<8x16xf32>
    %c0_1 = arith.constant 0 : index
    %c0_2 = arith.constant 0 : index
    %1 = vector.load %arg4[%c0_1, %c0_2] : memref<16x64xf32, #tpu.memory_space<vmem>>, vector<16x64xf32>
    %cst = arith.constant dense<0.000000e+00> : vector<8x64xf32>
    %2 = tpu.matmul %0, %1, %cst {dimension_numbers = #tpu.dot_dimension_numbers<[1], [0], [0], [1], [0, 0, 1, 1], [], []>} : vector<8x16xf32>, vector<16x64xf32>, vector<8x64xf32> -> vector<8x64xf32>
    %c0_3 = arith.constant 0 : index
    %c0_4 = arith.constant 0 : index
    %3 = vector.load %arg2[%c0_3, %c0_4] : memref<8x16xf32, #tpu.memory_space<vmem>>, vector<8x16xf32>
    %c0_5 = arith.constant 0 : index
    %c0_6 = arith.constant 0 : index
    %4 = vector.load %arg5[%c0_5, %c0_6] : memref<16x64xf32, #tpu.memory_space<vmem>>, vector<16x64xf32>
    %cst_7 = arith.constant dense<0.000000e+00> : vector<8x64xf32>
    %5 = tpu.matmul %3, %4, %cst_7 {dimension_numbers = #tpu.dot_dimension_numbers<[1], [0], [0], [1], [0, 0, 1, 1], [], []>} : vector<8x16xf32>, vector<16x64xf32>, vector<8x64xf32> -> vector<8x64xf32>
    %6 = arith.addf %2, %5 : vector<8x64xf32>
    %c0_8 = arith.constant 0 : index
    %c0_9 = arith.constant 0 : index
    %7 = vector.load %arg6[%c0_8, %c0_9] : memref<1x64xf32, #tpu.memory_space<vmem>>, vector<1x64xf32>
    %8 = vector.broadcast %7 : vector<1x64xf32> to vector<8x64xf32>
    %9 = arith.addf %6, %8 : vector<8x64xf32>
    %cst_10 = arith.constant 0.000000e+00 : f32
    %10 = vector.broadcast %cst_10 : f32 to vector<8x64xf32>
    %11 = arith.maximumf %9, %10 : vector<8x64xf32>
    %c0_11 = arith.constant 0 : index
    %c0_12 = arith.constant 0 : index
    %12 = vector.load %arg7[%c0_11, %c0_12] : memref<64x64xf32, #tpu.memory_space<vmem>>, vector<64x64xf32>
    %cst_13 = arith.constant dense<0.000000e+00> : vector<8x64xf32>
    %13 = tpu.matmul %11, %12, %cst_13 {dimension_numbers = #tpu.dot_dimension_numbers<[1], [0], [0], [1], [0, 0, 1, 1], [], []>} : vector<8x64xf32>, vector<64x64xf32>, vector<8x64xf32> -> vector<8x64xf32>
    %c0_14 = arith.constant 0 : index
    %c0_15 = arith.constant 0 : index
    %14 = vector.load %arg8[%c0_14, %c0_15] : memref<1x64xf32, #tpu.memory_space<vmem>>, vector<1x64xf32>
    %15 = vector.broadcast %14 : vector<1x64xf32> to vector<8x64xf32>
    %16 = arith.addf %13, %15 : vector<8x64xf32>
    %cst_16 = arith.constant 0.000000e+00 : f32
    %17 = vector.broadcast %cst_16 : f32 to vector<8x64xf32>
    %18 = arith.maximumf %16, %17 : vector<8x64xf32>
    %c0_17 = arith.constant 0 : index
    %c0_18 = arith.constant 0 : index
    %19 = vector.load %arg9[%c0_17, %c0_18] : memref<64x64xf32, #tpu.memory_space<vmem>>, vector<64x64xf32>
    %cst_19 = arith.constant dense<0.000000e+00> : vector<8x64xf32>
    %20 = tpu.matmul %18, %19, %cst_19 {dimension_numbers = #tpu.dot_dimension_numbers<[1], [0], [0], [1], [0, 0, 1, 1], [], []>} : vector<8x64xf32>, vector<64x64xf32>, vector<8x64xf32> -> vector<8x64xf32>
    %c0_20 = arith.constant 0 : index
    %c0_21 = arith.constant 0 : index
    %21 = vector.load %arg10[%c0_20, %c0_21] : memref<1x64xf32, #tpu.memory_space<vmem>>, vector<1x64xf32>
    %22 = vector.broadcast %21 : vector<1x64xf32> to vector<8x64xf32>
    %23 = arith.addf %20, %22 : vector<8x64xf32>
    %24 = vector.extract_strided_slice %23 {offsets = [0, 0], sizes = [8, 32], strides = [1, 1]} : vector<8x64xf32> to vector<8x32xf32>
    %25 = vector.extract_strided_slice %23 {offsets = [0, 32], sizes = [8, 32], strides = [1, 1]} : vector<8x64xf32> to vector<8x32xf32>
    %c0_22 = arith.constant 0 : index
    %c0_23 = arith.constant 0 : index
    %26 = vector.load %arg3[%c0_22, %c0_23] : memref<8x32xf32, #tpu.memory_space<vmem>>, vector<8x32xf32>
    %cst_24 = arith.constant 5.000000e-01 : f32
    %27 = vector.broadcast %cst_24 : f32 to vector<8x32xf32>
    %28 = arith.mulf %27, %25 : vector<8x32xf32>
    %29 = math.exp %28 : vector<8x32xf32>
    %30 = arith.mulf %26, %29 : vector<8x32xf32>
    %31 = arith.addf %30, %24 : vector<8x32xf32>
    %cst_25 = arith.constant 0.000000e+00 : f32
    %32 = vector.broadcast %cst_25 : f32 to vector<8x32xf32>
    %33 = tpu.concatenate %23, %31, %32 in 1 : vector<8x64xf32>, vector<8x32xf32>, vector<8x32xf32> -> vector<8x128xf32>
    %c0_26 = arith.constant 0 : index
    %c0_27 = arith.constant 0 : index
    %34 = vector.load %arg11[%c0_26, %c0_27] : memref<8x128xf32, #tpu.memory_space<vmem>>, vector<8x128xf32>
    tpu.vector_store %arg11[%c0_26, %c0_27], %33 {strides = array<i32>} : memref<8x128xf32, #tpu.memory_space<vmem>>, vector<8x128xf32>,
    return
  }
  func.func @transform_0(%arg0: i32) -> (i32, i32) {
    %c0_i32 = arith.constant 0 : i32
    %c0_i32_0 = arith.constant 0 : i32
    return %arg0, %c0_i32 : i32, i32
  }
  func.func @transform_1(%arg0: i32) -> (i32, i32) {
    %c0_i32 = arith.constant 0 : i32
    %c0_i32_0 = arith.constant 0 : i32
    return %arg0, %c0_i32 : i32, i32
  }
  func.func @transform_2(%arg0: i32) -> (i32, i32) {
    %c0_i32 = arith.constant 0 : i32
    %c0_i32_0 = arith.constant 0 : i32
    return %arg0, %c0_i32 : i32, i32
  }
  func.func @transform_3(%arg0: i32) -> (i32, i32) {
    %c0_i32 = arith.constant 0 : i32
    %c0_i32_0 = arith.constant 0 : i32
    %c0_i32_1 = arith.constant 0 : i32
    return %c0_i32, %c0_i32_0 : i32, i32
  }
  func.func @transform_4(%arg0: i32) -> (i32, i32) {
    %c0_i32 = arith.constant 0 : i32
    %c0_i32_0 = arith.constant 0 : i32
    %c0_i32_1 = arith.constant 0 : i32
    return %c0_i32, %c0_i32_0 : i32, i32
  }
  func.func @transform_5(%arg0: i32) -> (i32, i32) {
    %c0_i32 = arith.constant 0 : i32
    %c0_i32_0 = arith.constant 0 : i32
    %c0_i32_1 = arith.constant 0 : i32
    return %c0_i32, %c0_i32_0 : i32, i32
  }
  func.func @transform_6(%arg0: i32) -> (i32, i32) {
    %c0_i32 = arith.constant 0 : i32
    %c0_i32_0 = arith.constant 0 : i32
    %c0_i32_1 = arith.constant 0 : i32
    return %c0_i32, %c0_i32_0 : i32, i32
  }
  func.func @transform_7(%arg0: i32) -> (i32, i32) {
    %c0_i32 = arith.constant 0 : i32
    %c0_i32_0 = arith.constant 0 : i32
    %c0_i32_1 = arith.constant 0 : i32
    return %c0_i32, %c0_i32_0 : i32, i32
  }
  func.func @transform_8(%arg0: i32) -> (i32, i32) {
    %c0_i32 = arith.constant 0 : i32
    %c0_i32_0 = arith.constant 0 : i32
    %c0_i32_1 = arith.constant 0 : i32
    return %c0_i32, %c0_i32_0 : i32, i32
  }
  func.func @transform_9(%arg0: i32) -> (i32, i32) {
    %c0_i32 = arith.constant 0 : i32
    %c0_i32_0 = arith.constant 0 : i32
    %c0_i32_1 = arith.constant 0 : i32
    return %c0_i32, %c0_i32_0 : i32, i32
  }
  func.func @transform_10(%arg0: i32) -> (i32, i32) {
    %c0_i32 = arith.constant 0 : i32
    %c0_i32_0 = arith.constant 0 : i32
    return %arg0, %c0_i32 : i32, i32
  }
}

</mosaic_0001>

<llo_original>
// kernel: tpu_custom_call.1
$region0: #{tpu_custom_call.1}
  #allocation0 [shape = 'u32[]', space=smem, size = 0x4, offset = 0x4, fixed_abs, tag = 'smem constant byte address 0x4 - core index']
  #allocation1 [shape = 'u32[72,128]{1,0:T(1,128)}', space=vmem, size = 0x9000, scoped, tag = 'internal scratch']
  %s0 = inlined_call_operand.hbm [shape: f32[8,16], index: 0, kind: input, shape index: {}]
  %s1 = inlined_call_operand.hbm [shape: f32[8,16], index: 1, kind: input, shape index: {}]
  %s2 = inlined_call_operand.hbm [shape: f32[8,32], index: 2, kind: input, shape index: {}]
  %s3 = inlined_call_operand.hbm [shape: f32[16,64], index: 3, kind: input, shape index: {}]
  %s4 = inlined_call_operand.hbm [shape: f32[16,64], index: 4, kind: input, shape index: {}]
  %s5 = inlined_call_operand.vmem [shape: f32[1,64], index: 5, kind: input, shape index: {}]
  %s6 = inlined_call_operand.hbm [shape: f32[64,64], index: 6, kind: input, shape index: {}]
  %s7 = inlined_call_operand.vmem [shape: f32[1,64], index: 7, kind: input, shape index: {}]
  %s8 = inlined_call_operand.hbm [shape: f32[64,64], index: 8, kind: input, shape index: {}]
  %s9 = inlined_call_operand.vmem [shape: f32[1,64], index: 9, kind: input, shape index: {}]
  %s10 = inlined_call_operand.hbm [shape: f32[8,128], index: 10, kind: output, shape index: {}]
  %s11 = sld [smem:[#allocation0]]
  $region78: #{tpu_custom_call.1} parent=0
    _
  %s13 = ssub.s32 1, %s11
  %s14 = scalar_select 0, %s13, %s11
  $region1: #{tpu_custom_call.1} parent=0
    #allocation2 [shape = 'u8[4096]{0}', space=vmem, size = 0x1000, scoped, tag = 'input window, operand 0, single buffered']
    #allocation3 [shape = 's32[1]{0}', space=sflag, size = 0x4, scoped, tag = 'scoped memory for tpu_custom_call.1']
    #allocation4 [shape = 's32[1]{0}', space=sflag, size = 0x4, scoped, tag = 'scoped memory for tpu_custom_call.1']
    #allocation5 [shape = 'u8[4096]{0}', space=vmem, size = 0x1000, scoped, tag = 'input window, operand 1, single buffered']
    #allocation6 [shape = 's32[1]{0}', space=sflag, size = 0x4, scoped, tag = 'scoped memory for tpu_custom_call.1']
    #allocation7 [shape = 'u8[4096]{0}', space=vmem, size = 0x1000, scoped, tag = 'input window, operand 2, single buffered']
    #allocation8 [shape = 'u8[8192]{0}', space=vmem, size = 0x2000, scoped, tag = 'input window, operand 3, single buffered']
    #allocation9 [shape = 's32[1]{0}', space=sflag, size = 0x4, scoped, tag = 'scoped memory for tpu_custom_call.1']
    #allocation10 [shape = 'u8[8192]{0}', space=vmem, size = 0x2000, scoped, tag = 'input window, operand 4, single buffered']
    #allocation11 [shape = 'u8[32768]{0}', space=vmem, size = 0x8000, scoped, tag = 'input window, operand 6, single buffered']
    #allocation12 [shape = 's32[1]{0}', space=sflag, size = 0x4, scoped, tag = 'scoped memory for tpu_custom_call.1']
    #allocation13 [shape = 'u8[32768]{0}', space=vmem, size = 0x8000, scoped, tag = 'input window, operand 8, single buffered']
    #allocation14 [shape = 'u8[4096]{0}', space=vmem, size = 0x1000, scoped, tag = 'output window, operand 0, single buffered']
    %15 = vsyncpa [#allocation3], 0
    %16 = vsyncpa [#allocation6], 0
    %17 = vsyncpa [#allocation9], 0
    %18 = vsyncpa [#allocation12], 0
    %19 = vsyncpa [#allocation4], 0
    // Predicated region
    $region2: #{tpu_custom_call.1} parent=1 // pred_check
      _
    $region3: #{tpu_custom_call.1} parent=1 // pred_check_branch
      %21 = sbr.rel (0) target = $region5
    $region4: #{tpu_custom_call.1} parent=1 // pred_region
      %23 = vsyncadd [#allocation3], 0
      %s25 = sshll.u32 %s0, 4
      %s26 = int_to_ptr.hbm [resolvable:$true] %s25
      %s27 = sshll.u32 [#allocation2], 4
      %s28 = int_to_ptr.vmem [resolvable:$true] %s27
      %30 = dma.hbm_to_vmem [thread:$0]  %s26, 128, %s28, [#allocation3]
    $region5: #{tpu_custom_call.1} parent=1 // pred_fallthru
      _
    // Predicated region
    $region6: #{tpu_custom_call.1} parent=1 // pred_check
      _
    $region7: #{tpu_custom_call.1} parent=1 // pred_check_branch
      %32 = sbr.rel (0) target = $region9
    $region8: #{tpu_custom_call.1} parent=1 // pred_region
      %34 = vsyncadd [#allocation6], 0
      %s36 = sshll.u32 %s1, 4
      %s37 = int_to_ptr.hbm [resolvable:$true] %s36
      %s38 = sshll.u32 [#allocation5], 4
      %s39 = int_to_ptr.vmem [resolvable:$true] %s38
      %41 = dma.hbm_to_vmem [thread:$0]  %s37, 128, %s39, [#allocation6]
    $region9: #{tpu_custom_call.1} parent=1 // pred_fallthru
      _
    // Predicated region
    $region10: #{tpu_custom_call.1} parent=1 // pred_check
      _
    $region11: #{tpu_custom_call.1} parent=1 // pred_check_branch
      %43 = sbr.rel (0) target = $region13
    $region12: #{tpu_custom_call.1} parent=1 // pred_region
      %45 = vsyncadd [#allocation6], 0
      %s47 = sshll.u32 %s2, 4
      %s48 = int_to_ptr.hbm [resolvable:$true] %s47
      %s49 = sshll.u32 [#allocation7], 4
      %s50 = int_to_ptr.vmem [resolvable:$true] %s49
      %52 = dma.hbm_to_vmem [thread:$0]  %s48, 128, %s50, [#allocation6]
    $region13: #{tpu_custom_call.1} parent=1 // pred_fallthru
      _
    // Predicated region
    $region14: #{tpu_custom_call.1} parent=1 // pred_check
      _
    $region15: #{tpu_custom_call.1} parent=1 // pred_check_branch
      %54 = sbr.rel (0) target = $region17
    $region16: #{tpu_custom_call.1} parent=1 // pred_region
      %56 = vsyncadd [#allocation9], 0
      %s57 = sshll.u32 %s3, 4
      %s58 = int_to_ptr.hbm [resolvable:$true] %s57
      %s59 = sshll.u32 [#allocation8], 4
      %s60 = int_to_ptr.vmem [resolvable:$true] %s59
      %65 = dma.hbm_to_vmem [thread:$0]  %s58, 256, %s60, [#allocation9], 128, 128, 8
    $region17: #{tpu_custom_call.1} parent=1 // pred_fallthru
      _
    // Predicated region
    $region18: #{tpu_custom_call.1} parent=1 // pred_check
      _
    $region19: #{tpu_custom_call.1} parent=1 // pred_check_branch
      %67 = sbr.rel (0) target = $region21
    $region20: #{tpu_custom_call.1} parent=1 // pred_region
      %69 = vsyncadd [#allocation9], 0
      %s70 = sshll.u32 %s4, 4
      %s71 = int_to_ptr.hbm [resolvable:$true] %s70
      %s72 = sshll.u32 [#allocation10], 4
      %s73 = int_to_ptr.vmem [resolvable:$true] %s72
      %78 = dma.hbm_to_vmem [thread:$0]  %s71, 256, %s73, [#allocation9], 128, 128, 8
    $region21: #{tpu_custom_call.1} parent=1 // pred_fallthru
      _
    // Predicated region
    $region22: #{tpu_custom_call.1} parent=1 // pred_check
      _
    $region23: #{tpu_custom_call.1} parent=1 // pred_check_branch
      %80 = sbr.rel (0) target = $region25
    $region24: #{tpu_custom_call.1} parent=1 // pred_region
      _
    $region25: #{tpu_custom_call.1} parent=1 // pred_fallthru
      _
    // Predicated region
    $region26: #{tpu_custom_call.1} parent=1 // pred_check
      _
    $region27: #{tpu_custom_call.1} parent=1 // pred_check_branch
      %82 = sbr.rel (0) target = $region29
    $region28: #{tpu_custom_call.1} parent=1 // pred_region
      %84 = vsyncadd [#allocation12], 0
      %s85 = sshll.u32 %s6, 4
      %s86 = int_to_ptr.hbm [resolvable:$true] %s85
      %s87 = sshll.u32 [#allocation11], 4
      %s88 = int_to_ptr.vmem [resolvable:$true] %s87
      %93 = dma.hbm_to_vmem [thread:$0]  %s86, 1024, %s88, [#allocation12], 128, 128, 8
    $region29: #{tpu_custom_call.1} parent=1 // pred_fallthru
      _
    // Predicated region
    $region30: #{tpu_custom_call.1} parent=1 // pred_check
      _
    $region31: #{tpu_custom_call.1} parent=1 // pred_check_branch
      %95 = sbr.rel (0) target = $region33
    $region32: #{tpu_custom_call.1} parent=1 // pred_region
      _
    $region33: #{tpu_custom_call.1} parent=1 // pred_fallthru
      _
    // Predicated region
    $region34: #{tpu_custom_call.1} parent=1 // pred_check
      _
    $region35: #{tpu_custom_call.1} parent=1 // pred_check_branch
      %97 = sbr.rel (0) target = $region37
    $region36: #{tpu_custom_call.1} parent=1 // pred_region
      %99 = vsyncadd [#allocation12], 0
      %s100 = sshll.u32 %s8, 4
      %s101 = int_to_ptr.hbm [resolvable:$true] %s100
      %s102 = sshll.u32 [#allocation13], 4
      %s103 = int_to_ptr.vmem [resolvable:$true] %s102
      %108 = dma.hbm_to_vmem [thread:$0]  %s101, 1024, %s103, [#allocation12], 128, 128, 8
    $region37: #{tpu_custom_call.1} parent=1 // pred_fallthru
      _
    // Predicated region
    $region38: #{tpu_custom_call.1} parent=1 // pred_check
      _
    $region39: #{tpu_custom_call.1} parent=1 // pred_check_branch
      %110 = sbr.rel (0) target = $region41
    $region40: #{tpu_custom_call.1} parent=1 // pred_region
      _
    $region41: #{tpu_custom_call.1} parent=1 // pred_fallthru
      _
    // Predicated region
    $region42: #{tpu_custom_call.1} parent=1 // pred_check
      _
    $region43: #{tpu_custom_call.1} parent=1 // pred_check_branch
      %112 = sbr.rel (0) target = $region45
    $region44: #{tpu_custom_call.1} parent=1 // pred_region
      %114 = dma.done [#allocation3], 128
    $region45: #{tpu_custom_call.1} parent=1 // pred_fallthru
      _
    // Predicated region
    $region46: #{tpu_custom_call.1} parent=1 // pred_check
      _
    $region47: #{tpu_custom_call.1} parent=1 // pred_check_branch
      %116 = sbr.rel (0) target = $region49
    $region48: #{tpu_custom_call.1} parent=1 // pred_region
      %118 = dma.done [#allocation6], 128
    $region49: #{tpu_custom_call.1} parent=1 // pred_fallthru
      _
    // Predicated region
    $region50: #{tpu_custom_call.1} parent=1 // pred_check
      _
    $region51: #{tpu_custom_call.1} parent=1 // pred_check_branch
      %120 = sbr.rel (0) target = $region53
    $region52: #{tpu_custom_call.1} parent=1 // pred_region
      %122 = dma.done [#allocation6], 128
    $region53: #{tpu_custom_call.1} parent=1 // pred_fallthru
      _
    // Predicated region
    $region54: #{tpu_custom_call.1} parent=1 // pred_check
      _
    $region55: #{tpu_custom_call.1} parent=1 // pred_check_branch
      %124 = sbr.rel (0) target = $region57
    $region56: #{tpu_custom_call.1} parent=1 // pred_region
      %126 = dma.done [#allocation9], 256
    $region57: #{tpu_custom_call.1} parent=1 // pred_fallthru
      _
    // Predicated region
    $region58: #{tpu_custom_call.1} parent=1 // pred_check
      _
    $region59: #{tpu_custom_call.1} parent=1 // pred_check_branch
      %128 = sbr.rel (0) target = $region61
    $region60: #{tpu_custom_call.1} parent=1 // pred_region
      %130 = dma.done [#allocation9], 256
    $region61: #{tpu_custom_call.1} parent=1 // pred_fallthru
      _
    // Predicated region
    $region62: #{tpu_custom_call.1} parent=1 // pred_check
      _
    $region63: #{tpu_custom_call.1} parent=1 // pred_check_branch
      %132 = sbr.rel (0) target = $region65
    $region64: #{tpu_custom_call.1} parent=1 // pred_region
      %134 = dma.done [#allocation12], 1024
    $region65: #{tpu_custom_call.1} parent=1 // pred_fallthru
      _
    // Predicated region
    $region66: #{tpu_custom_call.1} parent=1 // pred_check
      _
    $region67: #{tpu_custom_call.1} parent=1 // pred_check_branch
      %136 = sbr.rel (0) target = $region69
    $region68: #{tpu_custom_call.1} parent=1 // pred_region
      %138 = dma.done [#allocation12], 1024
    $region69: #{tpu_custom_call.1} parent=1 // pred_fallthru
      _
    %v139 = vld [vmem:[#allocation2] sm:$0xff]
    %v140 = vld [vmem:[#allocation8] sm:$0xff]
    %v141 = vld [vmem:[#allocation8 + $0x8] sm:$0xff]
    %v142 = vld [vmem:[#allocation5] sm:$0xff]
    %v143 = vld [vmem:[#allocation10] sm:$0xff]
    %v144 = vld [vmem:[#allocation10 + $0x8] sm:$0xff]
    %vm145 = vcmask 130048
    %v147 = vsel %vm145, %v142, 0
    %149 = vmatpush.msra.mxu0 0.0
    %150 = vmatpush.msra.mxu0 0.0
    %151 = vmatpush.msra.mxu0 0.0
    %152 = vmatpush.msra.mxu0 0.0
    %153 = vmatpush.msra.mxu0 0.0
    %154 = vmatpush.msra.mxu0 0.0
    %155 = vmatpush.msra.mxu0 0.0
    %156 = vmatpush.msra.mxu0 0.0
    %157 = vmatpush.msra.mxu0 0.0
    %158 = vmatpush.msra.mxu0 0.0
    %159 = vmatpush.msra.mxu0 0.0
    %160 = vmatpush.msra.mxu0 0.0
    %161 = vmatpush.msra.mxu0 0.0
    %162 = vmatpush.msra.mxu0 0.0
    %163 = vmatpush.msra.mxu0 %v144
    %164 = vmatpush.msra.mxu0 %v143
    %165 = vmatmul.f32.gmra.mxu0 %v147
    %v166 = vpop.f32.mrf.mxu0
    %v167 = vadd.f32 0.0, %v166
    %168 = vdwg.mxu0
    %v170 = vsel %vm145, %v139, 0
    %172 = vmatpush.msra.mxu0 0.0
    %173 = vmatpush.msra.mxu0 0.0
    %174 = vmatpush.msra.mxu0 0.0
    %175 = vmatpush.msra.mxu0 0.0
    %176 = vmatpush.msra.mxu0 0.0
    %177 = vmatpush.msra.mxu0 0.0
    %178 = vmatpush.msra.mxu0 0.0
    %179 = vmatpush.msra.mxu0 0.0
    %180 = vmatpush.msra.mxu0 0.0
    %181 = vmatpush.msra.mxu0 0.0
    %182 = vmatpush.msra.mxu0 0.0
    %183 = vmatpush.msra.mxu0 0.0
    %184 = vmatpush.msra.mxu0 0.0
    %185 = vmatpush.msra.mxu0 0.0
    %186 = vmatpush.msra.mxu0 %v141
    %187 = vmatpush.msra.mxu0 %v140
    %188 = vmatmul.f32.gmra.mxu0 %v170
    %v189 = vpop.f32.mrf.mxu0
    %v190 = vadd.f32 %v167, %v189
    %191 = vdwg.mxu0
    %v192 = vld [vmem:[%s5] sm:$0x1]
    %v194 = vperm.slane %v192, 0
    %v196 = vadd.f32 %v190, %v194
    %v197 = vmax.f32 %v196, 0.0
    %v198 = vld [vmem:[#allocation11] sm:$0xff]
    %v199 = vld [vmem:[#allocation11 + $0x8] sm:$0xff]
    %v200 = vld [vmem:[#allocation11 + $0x10] sm:$0xff]
    %v201 = vld [vmem:[#allocation11 + $0x18] sm:$0xff]
    %v202 = vld [vmem:[#allocation11 + $0x20] sm:$0xff]
    %v203 = vld [vmem:[#allocation11 + $0x28] sm:$0xff]
    %v204 = vld [vmem:[#allocation11 + $0x30] sm:$0xff]
    %v205 = vld [vmem:[#allocation11 + $0x38] sm:$0xff]
    %v206 = vld [vmem:[%s7] sm:$0x1]
    %v208 = vperm.slane %v206, 0
    %vm210 = vcmask 523264
    %v212 = vsel %vm210, %v197, 0
    %214 = vmatpush.msra.mxu0 0.0
    %215 = vmatpush.msra.mxu0 0.0
    %216 = vmatpush.msra.mxu0 0.0
    %217 = vmatpush.msra.mxu0 0.0
    %218 = vmatpush.msra.mxu0 0.0
    %219 = vmatpush.msra.mxu0 0.0
    %220 = vmatpush.msra.mxu0 0.0
    %221 = vmatpush.msra.mxu0 0.0
    %222 = vmatpush.msra.mxu0 %v205
    %223 = vmatpush.msra.mxu0 %v204
    %224 = vmatpush.msra.mxu0 %v203
    %225 = vmatpush.msra.mxu0 %v202
    %226 = vmatpush.msra.mxu0 %v201
    %227 = vmatpush.msra.mxu0 %v200
    %228 = vmatpush.msra.mxu0 %v199
    %229 = vmatpush.msra.mxu0 %v198
    %230 = vmatmul.f32.gmra.mxu0 %v212
    %v231 = vpop.f32.mrf.mxu0
    %v232 = vadd.f32 %v208, %v231
    %233 = vdwg.mxu0
    %v234 = vmax.f32 %v232, 0.0
    %v235 = vld [vmem:[#allocation13] sm:$0xff]
    %v236 = vld [vmem:[#allocation13 + $0x8] sm:$0xff]
    %v237 = vld [vmem:[#allocation13 + $0x10] sm:$0xff]
    %v238 = vld [vmem:[#allocation13 + $0x18] sm:$0xff]
    %v239 = vld [vmem:[#allocation13 + $0x20] sm:$0xff]
    %v240 = vld [vmem:[#allocation13 + $0x28] sm:$0xff]
    %v241 = vld [vmem:[#allocation13 + $0x30] sm:$0xff]
    %v242 = vld [vmem:[#allocation13 + $0x38] sm:$0xff]
    %v243 = vld [vmem:[%s9] sm:$0x1]
    %v245 = vperm.slane %v243, 0
    %v248 = vsel %vm210, %v234, 0
    %250 = vmatpush.msra.mxu0 0.0
    %251 = vmatpush.msra.mxu0 0.0
    %252 = vmatpush.msra.mxu0 0.0
    %253 = vmatpush.msra.mxu0 0.0
    %254 = vmatpush.msra.mxu0 0.0
    %255 = vmatpush.msra.mxu0 0.0
    %256 = vmatpush.msra.mxu0 0.0
    %257 = vmatpush.msra.mxu0 0.0
    %258 = vmatpush.msra.mxu0 %v242
    %259 = vmatpush.msra.mxu0 %v241
    %260 = vmatpush.msra.mxu0 %v240
    %261 = vmatpush.msra.mxu0 %v239
    %262 = vmatpush.msra.mxu0 %v238
    %263 = vmatpush.msra.mxu0 %v237
    %264 = vmatpush.msra.mxu0 %v236
    %265 = vmatpush.msra.mxu0 %v235
    %266 = vmatmul.f32.gmra.mxu0 %v248
    %v267 = vpop.f32.mrf.mxu0
    %v268 = vadd.f32 %v245, %v267
    %269 = vdwg.mxu0
    %v270 = vld [vmem:[#allocation7] sm:$0xff]
    %v271 = vmul.f32 %v268, 0.5
    %v272 = vmul.f32 %v271, 1.442695
    %v273 = vpow.pop %v272
    %275 = vrot.lane.b32.xlu0 %v273, 96
    %v276 = vpop.permute.xlu0 %275
    %v278 = vmul.f32 %v270, %v276
    %v279 = vadd.f32 %v278, %v268
    %281 = vrot.lane.b32.xlu0 %v279, 64
    %v282 = vpop.permute.xlu0 %281
    %v284 = vsel %vm210, %v268, %v282
    %vm285 = vcmask 785408
    %v286 = vsel %vm285, %v284, 0.0
    %287 = vst [vmem:[#allocation14] sm:$0xff] %v286
    // Predicated region
    $region70: #{tpu_custom_call.1} parent=1 // pred_check
      _
    $region71: #{tpu_custom_call.1} parent=1 // pred_check_branch
      %289 = sbr.rel (0) target = $region73
    $region72: #{tpu_custom_call.1} parent=1 // pred_region
      %291 = vsyncadd [#allocation4], 0
      %s293 = sshll.u32 [#allocation14], 4
      %s294 = int_to_ptr.vmem [resolvable:$true] %s293
      %s295 = sshll.u32 %s10, 4
      %s296 = int_to_ptr.hbm [resolvable:$true] %s295
      %298 = dma.vmem_to_hbm [thread:$0]  %s294, 128, %s296, [#allocation4]
    $region73: #{tpu_custom_call.1} parent=1 // pred_fallthru
      _
    // Predicated region
    $region74: #{tpu_custom_call.1} parent=1 // pred_check
      _
    $region75: #{tpu_custom_call.1} parent=1 // pred_check_branch
      %300 = sbr.rel (0) target = $region77
    $region76: #{tpu_custom_call.1} parent=1 // pred_region
      %302 = dma.done [#allocation4], 128
    $region77: #{tpu_custom_call.1} parent=1 // pred_fallthru
      _
    %303 = vsyncpa [#allocation3], 1
    %304 = vsyncpa [#allocation6], 1
    %305 = vsyncpa [#allocation9], 1
    %306 = vsyncpa [#allocation12], 1
    %307 = vsyncpa [#allocation4], 1

</llo_original>
